<compile_context>
chip_gen: v5e
topology: v5e:2x2
jax: 0.10.0
libtpu: 0.0.40
codegen_flags: <defaults>
</compile_context>

<pallas_src>
import functools

import numpy as np

import jax
import jax.numpy as jnp
from jax.experimental import pallas as pl
from jax.experimental.pallas import tpu as pltpu


def _tv_loss_kernel(x_ref, mw_ref, mh_ref, o_ref, acc_ref, *, width):
    # x_ref  : (P, HW) block of flattened H*W planes for P (n, c) pairs.
    # mw_ref : (8, HW) f32 {0,1} mask for valid W-neighbour pairs (resident).
    # mh_ref : (8, HW) f32 {0,1} mask for valid H-neighbour pairs (resident).
    # o_ref  : (1, 8, 128) lane-dense partial-sum tile (written at finalize).
    # acc_ref: (8, HW) f32 VMEM accumulator.
    s = pl.program_id(1)

    @pl.when(s == 0)
    def _init():
        acc_ref[...] = jnp.zeros_like(acc_ref)

    x = x_ref[...]                                   # (P, HW), input dtype
    p, hw = x.shape

    # Neighbour values (jnp.roll convention):
    #   x_w[i] = x[(i + 1) % HW]      -> right neighbour along W
    #   x_h[i] = x[(i + W) % HW]      -> neighbour one row down along H
    x_w = pltpu.roll(x, shift=(hw - 1) % hw, axis=1)
    x_h = pltpu.roll(x, shift=(hw - width) % hw, axis=1)
    d_w = jnp.abs(x_w - x)                           # input dtype
    d_h = jnp.abs(x_h - x)

    g = p // 8
    mw = mw_ref[...]                                 # (8, HW) f32
    mh = mh_ref[...]
    # Masked contributions, folded over plane-groups with pure VPU adds.
    contrib = (d_w.reshape(g, 8, hw) * mw[None, :, :]
               + d_h.reshape(g, 8, hw) * mh[None, :, :])   # (g, 8, HW) f32
    acc_ref[...] += contrib.sum(axis=0)              # (8, HW) f32

    @pl.when(s == pl.num_programs(1) - 1)
    def _finalize():
        total = jnp.sum(acc_ref[...])                # tiny cross-lane reduce
        o_ref[...] = jnp.full(o_ref.shape, total, dtype=o_ref.dtype)


def _round_up(a, m):
    return (a + m - 1) // m * m


def _choose_planes_per_block(nc_pad, hw, itemsize, target_bytes):
    """Largest multiple-of-8 divisor of nc_pad whose (P, HW) block fits
    target_bytes (nc_pad is already a multiple of 8). Falls back to 8."""
    if nc_pad * hw * itemsize <= target_bytes:
        return nc_pad
    best = 8
    d = 8
    while d <= nc_pad:
        if nc_pad % d == 0 and d * hw * itemsize <= target_bytes:
            best = d
        d += 8
    return best


def tv_loss_forward(x, *, target_block_bytes=8 * 1024 * 1024):
    """Returns (input_passthrough, tv_loss_scalar) matching TVLoss.forward.

    x: (N, C, H, W) array (NCHW layout).
    """
    n, c, h, w = x.shape
    nc = n * c
    hw = h * w

    # Flatten each plane to a lane-dense row; pad plane count to a multiple
    # of 8 (zero planes contribute exactly 0 to the loss).
    x2 = x.reshape(nc, hw)
    nc_pad = _round_up(max(nc, 8), 8)
    if nc_pad != nc:
        x2 = jnp.concatenate(
            [x2, jnp.zeros((nc_pad - nc, hw), x2.dtype)], axis=0)

    p = _choose_planes_per_block(nc_pad, hw, x.dtype.itemsize,
                                 target_block_bytes)
    n_blocks = nc_pad // p
    # Up to 2 independent partials on a leading "parallel" axis (v7x 2-TC
    # split; harmless on single-TC v5e/v6e).
    n_partials = 2 if (n_blocks >= 2 and n_blocks % 2 == 0) else 1
    steps = n_blocks // n_partials

    # Precomputed {0,1} validity masks (constant per shape, resident in VMEM):
    #   mask_w[k] = 1 iff k % W != W-1   (right neighbour exists in same row)
    #   mask_h[k] = 1 iff k <  HW - W    (row below exists)
    col = np.arange(hw)
    mask_w = (col % w != w - 1).astype(np.float32)
    mask_h = (col < hw - w).astype(np.float32)
    mw = jnp.asarray(np.tile(mask_w[None, :], (8, 1)))
    mh = jnp.asarray(np.tile(mask_h[None, :], (8, 1)))

    kernel = functools.partial(_tv_loss_kernel, width=w)

    block_bytes = p * hw * x.dtype.itemsize
    # 2x input block (double buffer) + masks/acc/output + headroom, capped at
    # 64 MiB so it is safe on v7x's smaller per-core VMEM.
    vmem_limit = int(min(max(32 * 1024 * 1024,
                             2 * block_bytes + 4 * 1024 * 1024),
                         64 * 1024 * 1024))

    partials = pl.pallas_call(
        kernel,
        out_shape=jax.ShapeDtypeStruct((n_partials, 8, 128), jnp.float32),
        grid_spec=pltpu.PrefetchScalarGridSpec(
            num_scalar_prefetch=0,
            grid=(n_partials, steps),
            in_specs=[
                pl.BlockSpec((p, hw), lambda g, s: (g * steps + s, 0)),
                pl.BlockSpec((8, hw), lambda g, s: (0, 0)),   # mask_w, resident
                pl.BlockSpec((8, hw), lambda g, s: (0, 0)),   # mask_h, resident
            ],
            out_specs=pl.BlockSpec((1, 8, 128), lambda g, s: (g, 0, 0)),
            scratch_shapes=[pltpu.VMEM((8, hw), jnp.float32)],
        ),
        compiler_params=pltpu.CompilerParams(
            dimension_semantics=("parallel", "arbitrary"),
            vmem_limit_bytes=vmem_limit,
        ),
    )(x2, mw, mh)

    loss = jnp.sum(partials[:, 0, 0])
    # forward() returns the input unchanged; the loss is the side product.
    return x, loss


def _tv_loss_ref(x):
    xf = x.astype(jnp.float32)
    xd = xf[:, :, 1:, :] - xf[:, :, :-1, :]
    yd = xf[:, :, :, 1:] - xf[:, :, :, :-1]
    return jnp.sum(jnp.abs(xd)) + jnp.sum(jnp.abs(yd))


if __name__ == "__main__":
    key = jax.random.PRNGKey(0)
    x = jax.random.normal(key, (2, 4, 16, 16), dtype=jnp.float32)

    out, loss = tv_loss_forward(x)
    out = jax.block_until_ready(out)
    loss = jax.block_until_ready(loss)

    ref_loss = _tv_loss_ref(x)
    assert out.shape == x.shape and out.dtype == x.dtype
    assert jnp.allclose(out, x), "forward passthrough mismatch"
    assert jnp.allclose(loss, ref_loss, rtol=1e-4, atol=1e-3), (
        f"loss mismatch: {loss} vs {ref_loss}"
    )

    # Extra shape checks: H == 2 (previous double-count hazard) and a plane
    # count that is not a multiple of 8 (zero-padding path).
    for shape in [(1, 8, 2, 64), (1, 3, 4, 32)]:
        key, sub = jax.random.split(key)
        xt = jax.random.normal(sub, shape, dtype=jnp.float32)
        _, lt = tv_loss_forward(xt)
        lt = jax.block_until_ready(lt)
        rt = _tv_loss_ref(xt)
        assert jnp.allclose(lt, rt, rtol=1e-4, atol=1e-3), (
            f"loss mismatch at {shape}: {lt} vs {rt}"
        )

    print("KERNEL_OK")
</pallas_src>

<mosaic_0001>
module attributes {stable_mosaic.version = 11 : i64} {
  func.func @_tv_loss_kernel(%arg0: i32, %arg1: i32, %arg2: memref<8x256xf32, #tpu.memory_space<vmem>>, %arg3: memref<8x256xf32, #tpu.memory_space<vmem>>, %arg4: memref<8x256xf32, #tpu.memory_space<vmem>>, %arg5: memref<1x8x128xf32, #tpu.memory_space<vmem>>, %arg6: memref<8x256xf32, #tpu.memory_space<vmem>>) attributes {dimension_semantics = [#tpu.dimension_semantics<parallel>, #tpu.dimension_semantics<arbitrary>], iteration_bounds = array<i64: 1, 1>, scalar_prefetch = 0 : i64, scratch_operands = 1 : i64, tpu.core_type = #tpu.core_type<tc>, window_params = [{transform_indices = @transform_0, window_bounds = array<i64: 8, 256>}, {pipeline_mode = #tpu.pipeline_mode<synchronous>, transform_indices = @transform_1, window_bounds = array<i64: 8, 256>}, {pipeline_mode = #tpu.pipeline_mode<synchronous>, transform_indices = @transform_2, window_bounds = array<i64: 8, 256>}, {transform_indices = @transform_3, window_bounds = array<i64: 1, 8, 128>}]} {
    %c0_i32 = arith.constant 0 : i32
    %0 = arith.cmpi eq, %arg1, %c0_i32 : i32
    %1 = arith.extui %0 : i1 to i32
    %c0_i32_0 = arith.constant 0 : i32
    %2 = arith.cmpi ne, %1, %c0_i32_0 : i32
    scf.if %2 {
      %cst_12 = arith.constant 0.000000e+00 : f32
      %26 = vector.broadcast %cst_12 : f32 to vector<8x256xf32>
      %c0_13 = arith.constant 0 : index
      %c0_14 = arith.constant 0 : index
      %27 = vector.load %arg6[%c0_13, %c0_14] : memref<8x256xf32, #tpu.memory_space<vmem>>, vector<8x256xf32>
      tpu.vector_store %arg6[%c0_13, %c0_14], %26 {strides = array<i32>} : memref<8x256xf32, #tpu.memory_space<vmem>>, vector<8x256xf32>,
    } else {
    }
    %c0 = arith.constant 0 : index
    %c0_1 = arith.constant 0 : index
    %3 = vector.load %arg2[%c0, %c0_1] : memref<8x256xf32, #tpu.memory_space<vmem>>, vector<8x256xf32>
    %c255_i32 = arith.constant 255 : i32
    %4 = tpu.dynamic_rotate %3 by %c255_i32 dim 1 : vector<8x256xf32>, i32 -> vector<8x256xf32>
    %c240_i32 = arith.constant 240 : i32
    %5 = tpu.dynamic_rotate %3 by %c240_i32 dim 1 : vector<8x256xf32>, i32 -> vector<8x256xf32>
    %6 = arith.subf %4, %3 : vector<8x256xf32>
    %7 = math.absf %6 : vector<8x256xf32>
    %8 = arith.subf %5, %3 : vector<8x256xf32>
    %9 = math.absf %8 : vector<8x256xf32>
    %c0_2 = arith.constant 0 : index
    %c0_3 = arith.constant 0 : index
    %10 = vector.load %arg3[%c0_2, %c0_3] : memref<8x256xf32, #tpu.memory_space<vmem>>, vector<8x256xf32>
    %c0_4 = arith.constant 0 : index
    %c0_5 = arith.constant 0 : index
    %11 = vector.load %arg4[%c0_4, %c0_5] : memref<8x256xf32, #tpu.memory_space<vmem>>, vector<8x256xf32>
    %12 = vector.shape_cast %7 : vector<8x256xf32> to vector<1x8x256xf32>
    %13 = vector.shape_cast %10 : vector<8x256xf32> to vector<1x8x256xf32>
    %14 = arith.mulf %12, %13 : vector<1x8x256xf32>
    %15 = vector.shape_cast %9 : vector<8x256xf32> to vector<1x8x256xf32>
    %16 = vector.shape_cast %11 : vector<8x256xf32> to vector<1x8x256xf32>
    %17 = arith.mulf %15, %16 : vector<1x8x256xf32>
    %18 = arith.addf %14, %17 : vector<1x8x256xf32>
    %c0_6 = arith.constant 0 : index
    %c0_7 = arith.constant 0 : index
    %19 = vector.load %arg6[%c0_6, %c0_7] : memref<8x256xf32, #tpu.memory_space<vmem>>, vector<8x256xf32>
    %cst = arith.constant dense<0.000000e+00> : vector<8x256xf32>
    %20 = vector.multi_reduction <add>, %18, %cst [0] : vector<1x8x256xf32> to vector<8x256xf32>
    %21 = arith.addf %19, %20 : vector<8x256xf32>
    %c0_8 = arith.constant 0 : index
    %c0_9 = arith.constant 0 : index
    %22 = vector.load %arg6[%c0_8, %c0_9] : memref<8x256xf32, #tpu.memory_space<vmem>>, vector<8x256xf32>
    tpu.vector_store %arg6[%c0_8, %c0_9], %21 {strides = array<i32>} : memref<8x256xf32, #tpu.memory_space<vmem>>, vector<8x256xf32>,
    %c0_i32_10 = arith.constant 0 : i32
    %23 = arith.cmpi eq, %arg1, %c0_i32_10 : i32
    %24 = arith.extui %23 : i1 to i32
    %c0_i32_11 = arith.constant 0 : i32
    %25 = arith.cmpi ne, %24, %c0_i32_11 : i32
    scf.if %25 {
      %c0_12 = arith.constant 0 : index
      %c0_13 = arith.constant 0 : index
      %26 = vector.load %arg6[%c0_12, %c0_13] : memref<8x256xf32, #tpu.memory_space<vmem>>, vector<8x256xf32>
      %27 = vector.shape_cast %26 : vector<8x256xf32> to vector<1x8x256xf32>
      %cst_14 = arith.constant dense<0.000000e+00> : vector<1xf32>
      %28 = vector.multi_reduction <add>, %27, %cst_14 [1, 2] : vector<1x8x256xf32> to vector<1xf32>
      %29 = vector.shape_cast %28 : vector<1xf32> to vector<1x1x1xf32>
      %30 = vector.extract %29[0, 0, 0] : f32 from vector<1x1x1xf32>
      %31 = vector.broadcast %30 : f32 to vector<1x8x128xf32>
      %c0_15 = arith.constant 0 : index
      %c0_16 = arith.constant 0 : index
      %c0_17 = arith.constant 0 : index
      %32 = vector.load %arg5[%c0_15, %c0_16, %c0_17] : memref<1x8x128xf32, #tpu.memory_space<vmem>>, vector<1x8x128xf32>
      tpu.vector_store %arg5[%c0_15, %c0_16, %c0_17], %31 {strides = array<i32>} : memref<1x8x128xf32, #tpu.memory_space<vmem>>, vector<1x8x128xf32>,
    } else {
    }
    return
  }
  func.func @transform_0(%arg0: i32, %arg1: i32) -> (i32, i32) {
    %c1_i32 = arith.constant 1 : i32
    %0 = arith.muli %arg0, %c1_i32 : i32
    %1 = arith.addi %0, %arg1 : i32
    %c0_i32 = arith.constant 0 : i32
    %c0_i32_0 = arith.constant 0 : i32
    return %1, %c0_i32 : i32, i32
  }
  func.func @transform_1(%arg0: i32, %arg1: i32) -> (i32, i32) {
    %c0_i32 = arith.constant 0 : i32
    %c0_i32_0 = arith.constant 0 : i32
    %c0_i32_1 = arith.constant 0 : i32
    return %c0_i32, %c0_i32_0 : i32, i32
  }
  func.func @transform_2(%arg0: i32, %arg1: i32) -> (i32, i32) {
    %c0_i32 = arith.constant 0 : i32
    %c0_i32_0 = arith.constant 0 : i32
    %c0_i32_1 = arith.constant 0 : i32
    return %c0_i32, %c0_i32_0 : i32, i32
  }
  func.func @transform_3(%arg0: i32, %arg1: i32) -> (i32, i32, i32) {
    %c0_i32 = arith.constant 0 : i32
    %c0_i32_0 = arith.constant 0 : i32
    %c0_i32_1 = arith.constant 0 : i32
    return %arg0, %c0_i32, %c0_i32_0 : i32, i32, i32
  }
}

</mosaic_0001>

<llo_original>
// kernel: tpu_custom_call.1
$region0: #{tpu_custom_call.1}
  #allocation0 [shape = 'u32[]', space=smem, size = 0x4, offset = 0x4, fixed_abs, tag = 'smem constant byte address 0x4 - core index']
  #allocation1 [shape = 'u32[72,128]{1,0:T(1,128)}', space=vmem, size = 0x9000, scoped, tag = 'internal scratch']
  #allocation2 [shape = 'f32[8,256]{1,0:T(8,128)}', space=vmem, size = 0x2000, scoped, tag = 'scratch operand']
  %s0 = inlined_call_operand.hbm [shape: f32[8,256], index: 0, kind: input, shape index: {}]
  %s1 = inlined_call_operand.hbm [shape: f32[8,256], index: 1, kind: input, shape index: {}]
  %s2 = inlined_call_operand.hbm [shape: f32[8,256], index: 2, kind: input, shape index: {}]
  %s3 = inlined_call_operand.hbm [shape: f32[1,8,128], index: 3, kind: output, shape index: {}]
  %s4 = sld [smem:[#allocation0]]
  $region42: #{tpu_custom_call.1} parent=0
    _
  %s6 = ssub.s32 1, %s4
  %s7 = scalar_select 0, %s6, %s4
  $region1: #{tpu_custom_call.1} parent=0
    #allocation3 [shape = 'u8[8192]{0}', space=vmem, size = 0x2000, scoped, tag = 'input window, operand 0, single buffered']
    #allocation4 [shape = 's32[1]{0}', space=sflag, size = 0x4, scoped, tag = 'scoped memory for tpu_custom_call.1']
    #allocation5 [shape = 's32[1]{0}', space=sflag, size = 0x4, scoped, tag = 'scoped memory for tpu_custom_call.1']
    #allocation6 [shape = 'u8[8192]{0}', space=vmem, size = 0x2000, scoped, tag = 'input window, operand 1, single buffered']
    #allocation7 [shape = 's32[1]{0}', space=sflag, size = 0x4, scoped, tag = 'scoped memory for tpu_custom_call.1']
    #allocation8 [shape = 'u8[8192]{0}', space=vmem, size = 0x2000, scoped, tag = 'input window, operand 2, single buffered']
    #allocation9 [shape = 'u8[4096]{0}', space=vmem, size = 0x1000, scoped, tag = 'output window, operand 0, single buffered']
    %8 = vsyncpa [#allocation4], 0
    %9 = vsyncpa [#allocation7], 0
    %10 = vsyncpa [#allocation5], 0
    // Predicated region
    $region2: #{tpu_custom_call.1} parent=1 // pred_check
      _
    $region3: #{tpu_custom_call.1} parent=1 // pred_check_branch
      %12 = sbr.rel (0) target = $region5
    $region4: #{tpu_custom_call.1} parent=1 // pred_region
      %s13 = sadd.s32 0, 0
      %15 = vsyncadd [#allocation4], 0
      %s16 = smul.addr %s13, 2
      %s17 = smul.addr %s16, 8
      %s18 = scalar_lea.hbm %s0, %s17
      %s20 = sshll.u32 %s18, 4
      %s21 = int_to_ptr.hbm [resolvable:$true] %s20
      %s22 = sshll.u32 [#allocation3], 4
      %s23 = int_to_ptr.vmem [resolvable:$true] %s22
      %25 = dma.hbm_to_vmem [thread:$0]  %s21, 256, %s23, [#allocation4]
    $region5: #{tpu_custom_call.1} parent=1 // pred_fallthru
      _
    // Predicated region
    $region6: #{tpu_custom_call.1} parent=1 // pred_check
      _
    $region7: #{tpu_custom_call.1} parent=1 // pred_check_branch
      %27 = sbr.rel (0) target = $region9
    $region8: #{tpu_custom_call.1} parent=1 // pred_region
      %29 = vsyncadd [#allocation7], 0
      %s31 = sshll.u32 %s1, 4
      %s32 = int_to_ptr.hbm [resolvable:$true] %s31
      %s33 = sshll.u32 [#allocation6], 4
      %s34 = int_to_ptr.vmem [resolvable:$true] %s33
      %36 = dma.hbm_to_vmem [thread:$0]  %s32, 256, %s34, [#allocation7]
    $region9: #{tpu_custom_call.1} parent=1 // pred_fallthru
      _
    // Predicated region
    $region10: #{tpu_custom_call.1} parent=1 // pred_check
      _
    $region11: #{tpu_custom_call.1} parent=1 // pred_check_branch
      %38 = sbr.rel (0) target = $region13
    $region12: #{tpu_custom_call.1} parent=1 // pred_region
      %40 = vsyncadd [#allocation7], 0
      %s42 = sshll.u32 %s2, 4
      %s43 = int_to_ptr.hbm [resolvable:$true] %s42
      %s44 = sshll.u32 [#allocation8], 4
      %s45 = int_to_ptr.vmem [resolvable:$true] %s44
      %47 = dma.hbm_to_vmem [thread:$0]  %s43, 256, %s45, [#allocation7]
    $region13: #{tpu_custom_call.1} parent=1 // pred_fallthru
      _
    // Predicated region
    $region14: #{tpu_custom_call.1} parent=1 // pred_check
      _
    $region15: #{tpu_custom_call.1} parent=1 // pred_check_branch
      %49 = sbr.rel (0) target = $region17
    $region16: #{tpu_custom_call.1} parent=1 // pred_region
      %51 = dma.done [#allocation4], 256
    $region17: #{tpu_custom_call.1} parent=1 // pred_fallthru
      _
    // Predicated region
    $region18: #{tpu_custom_call.1} parent=1 // pred_check
      _
    $region19: #{tpu_custom_call.1} parent=1 // pred_check_branch
      %53 = sbr.rel (0) target = $region21
    $region20: #{tpu_custom_call.1} parent=1 // pred_region
      %55 = dma.done [#allocation7], 256
    $region21: #{tpu_custom_call.1} parent=1 // pred_fallthru
      _
    // Predicated region
    $region22: #{tpu_custom_call.1} parent=1 // pred_check
      _
    $region23: #{tpu_custom_call.1} parent=1 // pred_check_branch
      %57 = sbr.rel (0) target = $region25
    $region24: #{tpu_custom_call.1} parent=1 // pred_region
      %59 = dma.done [#allocation7], 256
    $region25: #{tpu_custom_call.1} parent=1 // pred_fallthru
      _
    %s60 = sadd.s32 0, 0
    %p61 = scmp.eq.s32.totalorder 0, 0
    // Predicated region
    $region26: #{tpu_custom_call.1} parent=1 // pred_check
      %p62 = pneg %p61
    $region27: #{tpu_custom_call.1} parent=1 // pred_check_branch
      %64 = sbr.rel (%p62) target = $region29
    $region28: #{tpu_custom_call.1} parent=1 // pred_region
      %65 = vst [vmem:[#allocation2] sm:$0xff] 0.0
      %66 = vst [vmem:[#allocation2 + $0x8] sm:$0xff] 0.0
    $region29: #{tpu_custom_call.1} parent=1 // pred_fallthru
      _
    %v67 = vld [vmem:[#allocation3] sm:$0xff]
    %v68 = vld [vmem:[#allocation3 + $0x8] sm:$0xff]
    %69 = vrot.lane.b32.xlu0 %v67, 127
    %v70 = vpop.permute.xlu0 %69
    %71 = vrot.lane.b32.xlu0 %v68, 127
    %v72 = vpop.permute.xlu0 %71
    %v73 = vlaneseq
    %v74 = vand.u32 %v73, 127
    %vm75 = vcmp.lt.s32.totalorder %v74, 127
    %v76 = vsel %vm75, %v70, %v72
    %v77 = vsel %vm75, %v72, %v70
    %78 = vrot.lane.b32.xlu0 %v67, 112
    %v79 = vpop.permute.xlu0 %78
    %80 = vrot.lane.b32.xlu0 %v68, 112
    %v81 = vpop.permute.xlu0 %80
    %vm82 = vcmp.lt.s32.totalorder %v74, 112
    %v83 = vsel %vm82, %v79, %v81
    %v84 = vsel %vm82, %v81, %v79
    %v85 = vsub.f32 %v76, %v67
    %v86 = vsub.f32 %v77, %v68
    %v87 = vand.u32 2147483647, %v85
    %v88 = vand.u32 2147483647, %v86
    %v89 = vsub.f32 %v83, %v67
    %v90 = vsub.f32 %v84, %v68
    %v91 = vand.u32 2147483647, %v89
    %v92 = vand.u32 2147483647, %v90
    %v93 = vld [vmem:[#allocation6] sm:$0xff]
    %v94 = vld [vmem:[#allocation6 + $0x8] sm:$0xff]
    %v95 = vld [vmem:[#allocation8] sm:$0xff]
    %v96 = vld [vmem:[#allocation8 + $0x8] sm:$0xff]
    %v97 = vmul.f32 %v87, %v93
    %v98 = vmul.f32 %v88, %v94
    %v99 = vmul.f32 %v91, %v95
    %v100 = vmul.f32 %v92, %v96
    %v101 = vadd.f32 %v97, %v99
    %v102 = vadd.f32 %v98, %v100
    %v103 = vld [vmem:[#allocation2] sm:$0xff]
    %v104 = vld [vmem:[#allocation2 + $0x8] sm:$0xff]
    %v105 = vadd.f32 %v101, 0.0
    %v106 = vadd.f32 %v102, 0.0
    %v107 = vadd.f32 %v103, %v105
    %v108 = vadd.f32 %v104, %v106
    %109 = vst [vmem:[#allocation2] sm:$0xff] %v107
    %110 = vst [vmem:[#allocation2 + $0x8] sm:$0xff] %v108
    // Predicated region
    $region30: #{tpu_custom_call.1} parent=1 // pred_check
      %p111 = pneg %p61
    $region31: #{tpu_custom_call.1} parent=1 // pred_check_branch
      %113 = sbr.rel (%p111) target = $region33
    $region32: #{tpu_custom_call.1} parent=1 // pred_region
      %v114 = vld [vmem:[#allocation2] sm:$0xff]
      %v115 = vld [vmem:[#allocation2 + $0x8] sm:$0xff]
      %v116 = vadd.f32 %v114, %v115
      %117 = vadd.xlane.f32.xlu0 %v116
      %v118 = vpop.xlane.xlu0 %117
      %v119 = vrot.slane %v118, 4
      %v120 = vadd.f32 %v118, %v119
      %v121 = vrot.slane %v120, 2
      %v122 = vadd.f32 %v120, %v121
      %v123 = vrot.slane %v122, 1
      %v124 = vadd.f32 %v122, %v123
      %s125 = vtos %v124
      %v126 = vstv %s125
      %127 = vst [vmem:[#allocation9] sm:$0xff] %v126
    $region33: #{tpu_custom_call.1} parent=1 // pred_fallthru
      _
    // Predicated region
    $region34: #{tpu_custom_call.1} parent=1 // pred_check
      _
    $region35: #{tpu_custom_call.1} parent=1 // pred_check_branch
      %129 = sbr.rel (0) target = $region37
    $region36: #{tpu_custom_call.1} parent=1 // pred_region
      %131 = vsyncadd [#allocation5], 0
      %s133 = sshll.u32 [#allocation9], 4
      %s134 = int_to_ptr.vmem [resolvable:$true] %s133
      %s135 = sshll.u32 %s3, 4
      %s136 = int_to_ptr.hbm [resolvable:$true] %s135
      %138 = dma.vmem_to_hbm [thread:$0]  %s134, 128, %s136, [#allocation5]
    $region37: #{tpu_custom_call.1} parent=1 // pred_fallthru
      _
    // Predicated region
    $region38: #{tpu_custom_call.1} parent=1 // pred_check
      _
    $region39: #{tpu_custom_call.1} parent=1 // pred_check_branch
      %140 = sbr.rel (0) target = $region41
    $region40: #{tpu_custom_call.1} parent=1 // pred_region
      %142 = dma.done [#allocation5], 128
    $region41: #{tpu_custom_call.1} parent=1 // pred_fallthru
      _
    %143 = vsyncpa [#allocation4], 1
    %144 = vsyncpa [#allocation7], 1
    %145 = vsyncpa [#allocation5], 1

</llo_original>
